<compile_context>
chip_gen: v7x
topology: tpu7x:2x2x1
jax: 0.10.0
libtpu: 0.0.40
codegen_flags: <defaults>
</compile_context>

<pallas_src>
import jax
import jax.numpy as jnp
from jax.experimental import pallas as pl
from jax.experimental.pallas import tpu as pltpu

LANE = 128


def tabular_mlp_kernel(xe_ref, xc_ref, w1e_ref, w1c_ref, b1_ref, w2_ref, b2_ref,
                       o_ref):
    # First Linear with bn_cont folded into w1c/b1 (split matmul avoids the
    # HBM concat of [emb | cont]):  h = relu(x_emb @ W1e + x_cont @ W1c' + b1')
    h = jnp.dot(xe_ref[...], w1e_ref[...], preferred_element_type=jnp.float32)
    h = h + jnp.dot(xc_ref[...], w1c_ref[...], preferred_element_type=jnp.float32)
    h = jnp.maximum(h + b1_ref[...], 0.0)
    # Second Linear with the hidden BatchNorm folded into w2/b2
    # (w2/b2 are zero-padded to a 128-lane-dense output slab).
    o_ref[...] = (jnp.dot(h, w2_ref[...], preferred_element_type=jnp.float32)
                  + b2_ref[...])


def tabular_forward(x_cat, x_cont, params, *, tile_m=256):
    eps = 1e-5

    # ---- glue: embedding lookups (gather is not the hot path) ----
    embs = [tbl[x_cat[:, i]] for i, tbl in enumerate(params["emb_tables"])]
    x_emb = jnp.concatenate(embs, axis=1).astype(jnp.float32)     # (B, n_emb)
    x_cont = x_cont.astype(jnp.float32)                           # (B, n_cont)

    B, n_emb = x_emb.shape
    n_cont = x_cont.shape[1]
    hidden = params["w1"].shape[1]
    out_sz = params["w2"].shape[1]

    # ---- fold eval-mode BatchNorms directly into the weights / biases ----
    # bn_cont:  xc' = xc * s_c + t_c  ->  folded into the cont rows of W1 and b1.
    s_c = params["bn_cont_gamma"] / jnp.sqrt(params["bn_cont_var"] + eps)
    t_c = params["bn_cont_beta"] - params["bn_cont_mean"] * s_c
    w1_emb = params["w1"][:n_emb]                                  # (n_emb, hidden)
    w1_cont = params["w1"][n_emb:] * s_c[:, None]                  # (n_cont, hidden)
    b1 = params["b1"] + t_c @ params["w1"][n_emb:]                 # (hidden,)

    # bn1 (post-ReLU):  h' = h * s_1 + t_1  ->  folded into W2 and b2.
    s_1 = params["bn1_gamma"] / jnp.sqrt(params["bn1_var"] + eps)
    t_1 = params["bn1_beta"] - params["bn1_mean"] * s_1
    w2 = params["w2"] * s_1[:, None]                               # (hidden, out_sz)
    b2 = params["b2"] + t_1 @ params["w2"]                         # (out_sz,)

    # ---- lane-dense output: pad out_sz up to a multiple of 128 ----
    out_pad = max(LANE, ((out_sz + LANE - 1) // LANE) * LANE)
    w2 = jnp.pad(w2, ((0, 0), (0, out_pad - out_sz)))
    b2 = jnp.pad(b2, (0, out_pad - out_sz))

    # ---- batch tiling: clamp tile to batch, pad batch so nothing is dropped ----
    b_round8 = ((B + 7) // 8) * 8
    tile_m = min(int(tile_m), b_round8)
    tile_m = max(8, (tile_m // 8) * 8)
    B_pad = ((B + tile_m - 1) // tile_m) * tile_m
    if B_pad != B:
        x_emb = jnp.pad(x_emb, ((0, B_pad - B), (0, 0)))
        x_cont = jnp.pad(x_cont, ((0, B_pad - B), (0, 0)))

    row = lambda v: v.reshape(1, -1).astype(jnp.float32)
    full = lambda shape: pl.BlockSpec(shape, lambda i: (0, 0))

    out = pl.pallas_call(
        tabular_mlp_kernel,
        out_shape=jax.ShapeDtypeStruct((B_pad, out_pad), jnp.float32),
        grid_spec=pl.GridSpec(
            grid=(B_pad // tile_m,),
            in_specs=[
                pl.BlockSpec((tile_m, n_emb), lambda i: (i, 0)),   # x_emb block
                pl.BlockSpec((tile_m, n_cont), lambda i: (i, 0)),  # x_cont block
                full((n_emb, hidden)),                             # W1 (emb rows)
                full((n_cont, hidden)),                            # W1 (cont rows, BN-folded)
                full((1, hidden)),                                 # b1'
                full((hidden, out_pad)),                           # W2 (BN-folded, padded)
                full((1, out_pad)),                                # b2' (padded)
            ],
            out_specs=pl.BlockSpec((tile_m, out_pad), lambda i: (i, 0)),
        ),
        compiler_params=pltpu.CompilerParams(
            dimension_semantics=("parallel",)),
    )(x_emb, x_cont, w1_emb, w1_cont, row(b1), w2, row(b2))

    return out[:B, :out_sz]


def reference_forward(x_cat, x_cont, params):
    """Pure-JAX reference mirroring the PyTorch eval-mode forward."""
    eps = 1e-5
    embs = [tbl[x_cat[:, i]] for i, tbl in enumerate(params["emb_tables"])]
    x = jnp.concatenate(embs, axis=1)
    xc = (x_cont - params["bn_cont_mean"]) / jnp.sqrt(params["bn_cont_var"] + eps)
    xc = xc * params["bn_cont_gamma"] + params["bn_cont_beta"]
    x = jnp.concatenate([x, xc], axis=1)
    h = x @ params["w1"] + params["b1"]
    h = jnp.maximum(h, 0.0)
    h = (h - params["bn1_mean"]) / jnp.sqrt(params["bn1_var"] + eps)
    h = h * params["bn1_gamma"] + params["bn1_beta"]
    return h @ params["w2"] + params["b2"]


def init_params(key, emb_szs, n_cont, hidden, out_sz):
    n_emb = sum(nf for _, nf in emb_szs)
    n_in = n_emb + n_cont
    keys = jax.random.split(key, 12 + len(emb_szs))
    params = {}
    params["emb_tables"] = [
        jax.random.normal(keys[i], (ni, nf), jnp.float32) * 0.1
        for i, (ni, nf) in enumerate(emb_szs)
    ]
    k = len(emb_szs)
    params["bn_cont_gamma"] = jax.random.uniform(keys[k + 0], (n_cont,), jnp.float32, 0.5, 1.5)
    params["bn_cont_beta"] = jax.random.normal(keys[k + 1], (n_cont,), jnp.float32) * 0.1
    params["bn_cont_mean"] = jax.random.normal(keys[k + 2], (n_cont,), jnp.float32) * 0.1
    params["bn_cont_var"] = jax.random.uniform(keys[k + 3], (n_cont,), jnp.float32, 0.5, 1.5)
    params["w1"] = jax.random.normal(keys[k + 4], (n_in, hidden), jnp.float32) * 0.1
    params["b1"] = jax.random.normal(keys[k + 5], (hidden,), jnp.float32) * 0.05
    params["bn1_gamma"] = jax.random.uniform(keys[k + 6], (hidden,), jnp.float32, 0.5, 1.5)
    params["bn1_beta"] = jax.random.normal(keys[k + 7], (hidden,), jnp.float32) * 0.1
    params["bn1_mean"] = jax.random.normal(keys[k + 8], (hidden,), jnp.float32) * 0.1
    params["bn1_var"] = jax.random.uniform(keys[k + 9], (hidden,), jnp.float32, 0.5, 1.5)
    params["w2"] = jax.random.normal(keys[k + 10], (hidden, out_sz), jnp.float32) * 0.1
    params["b2"] = jax.random.normal(keys[k + 11], (out_sz,), jnp.float32) * 0.05
    return params


if __name__ == "__main__":
    # Synthetic category sizes (sex, education, marital-status, workclass, occupation)
    ctg_szs = [2, 16, 7, 15, 6]
    emb_szs = [(s, min(50, s + 1) // 2) for s in ctg_szs]   # -> dims [1, 8, 4, 8, 3]
    n_cont = 2           # e.g. age, hours-per-week
    hidden = 32          # layers=[32]
    out_sz = 2
    B = 64

    key = jax.random.PRNGKey(0)
    kp, kc, kx = jax.random.split(key, 3)
    params = init_params(kp, emb_szs, n_cont, hidden, out_sz)

    cat_keys = jax.random.split(kc, len(ctg_szs))
    x_cat = jnp.stack(
        [jax.random.randint(cat_keys[i], (B,), 0, ctg_szs[i], jnp.int32)
         for i in range(len(ctg_szs))], axis=1)               # (B, 5) int32
    x_cont = jax.random.normal(kx, (B, n_cont), jnp.float32)  # (B, 2) f32

    out = tabular_forward(x_cat, x_cont, params)              # single grid step for B=64
    out = jax.block_until_ready(out)

    ref = reference_forward(x_cat, x_cont, params)
    assert out.shape == (B, out_sz)
    assert jnp.allclose(out, ref, atol=1e-4, rtol=1e-4), "mismatch vs reference"
    print("KERNEL_OK")
</pallas_src>

<mosaic_0001>
module attributes {stable_mosaic.version = 11 : i64} {
  func.func @tabular_mlp_kernel(%arg0: i32, %arg1: memref<64x24xf32, #tpu.memory_space<vmem>>, %arg2: memref<64x2xf32, #tpu.memory_space<vmem>>, %arg3: memref<24x32xf32, #tpu.memory_space<vmem>>, %arg4: memref<2x32xf32, #tpu.memory_space<vmem>>, %arg5: memref<1x32xf32, #tpu.memory_space<vmem>>, %arg6: memref<32x128xf32, #tpu.memory_space<vmem>>, %arg7: memref<1x128xf32, #tpu.memory_space<vmem>>, %arg8: memref<64x128xf32, #tpu.memory_space<vmem>>) attributes {dimension_semantics = [#tpu.dimension_semantics<parallel>], iteration_bounds = array<i64: 1>, scalar_prefetch = 0 : i64, scratch_operands = 0 : i64, tpu.core_type = #tpu.core_type<tc>, window_params = [{transform_indices = @transform_0, window_bounds = array<i64: 64, 24>}, {transform_indices = @transform_1, window_bounds = array<i64: 64, 2>}, {pipeline_mode = #tpu.pipeline_mode<synchronous>, transform_indices = @transform_2, window_bounds = array<i64: 24, 32>}, {pipeline_mode = #tpu.pipeline_mode<synchronous>, transform_indices = @transform_3, window_bounds = array<i64: 2, 32>}, {pipeline_mode = #tpu.pipeline_mode<synchronous>, transform_indices = @transform_4, window_bounds = array<i64: 1, 32>}, {pipeline_mode = #tpu.pipeline_mode<synchronous>, transform_indices = @transform_5, window_bounds = array<i64: 32, 128>}, {pipeline_mode = #tpu.pipeline_mode<synchronous>, transform_indices = @transform_6, window_bounds = array<i64: 1, 128>}, {transform_indices = @transform_7, window_bounds = array<i64: 64, 128>}]} {
    %c0 = arith.constant 0 : index
    %c0_0 = arith.constant 0 : index
    %0 = vector.load %arg1[%c0, %c0_0] : memref<64x24xf32, #tpu.memory_space<vmem>>, vector<64x24xf32>
    %c0_1 = arith.constant 0 : index
    %c0_2 = arith.constant 0 : index
    %1 = vector.load %arg3[%c0_1, %c0_2] : memref<24x32xf32, #tpu.memory_space<vmem>>, vector<24x32xf32>
    %cst = arith.constant dense<0.000000e+00> : vector<64x32xf32>
    %2 = tpu.matmul %0, %1, %cst {dimension_numbers = #tpu.dot_dimension_numbers<[1], [0], [0], [1], [0, 0, 1, 1], [], []>} : vector<64x24xf32>, vector<24x32xf32>, vector<64x32xf32> -> vector<64x32xf32>
    %c0_3 = arith.constant 0 : index
    %c0_4 = arith.constant 0 : index
    %3 = vector.load %arg2[%c0_3, %c0_4] : memref<64x2xf32, #tpu.memory_space<vmem>>, vector<64x2xf32>
    %c0_5 = arith.constant 0 : index
    %c0_6 = arith.constant 0 : index
    %4 = vector.load %arg4[%c0_5, %c0_6] : memref<2x32xf32, #tpu.memory_space<vmem>>, vector<2x32xf32>
    %cst_7 = arith.constant dense<0.000000e+00> : vector<64x32xf32>
    %5 = tpu.matmul %3, %4, %cst_7 {dimension_numbers = #tpu.dot_dimension_numbers<[1], [0], [0], [1], [0, 0, 1, 1], [], []>} : vector<64x2xf32>, vector<2x32xf32>, vector<64x32xf32> -> vector<64x32xf32>
    %6 = arith.addf %2, %5 : vector<64x32xf32>
    %c0_8 = arith.constant 0 : index
    %c0_9 = arith.constant 0 : index
    %7 = vector.load %arg5[%c0_8, %c0_9] : memref<1x32xf32, #tpu.memory_space<vmem>>, vector<1x32xf32>
    %8 = vector.broadcast %7 : vector<1x32xf32> to vector<64x32xf32>
    %9 = arith.addf %6, %8 : vector<64x32xf32>
    %cst_10 = arith.constant 0.000000e+00 : f32
    %10 = vector.broadcast %cst_10 : f32 to vector<64x32xf32>
    %11 = arith.maximumf %9, %10 : vector<64x32xf32>
    %c0_11 = arith.constant 0 : index
    %c0_12 = arith.constant 0 : index
    %12 = vector.load %arg6[%c0_11, %c0_12] : memref<32x128xf32, #tpu.memory_space<vmem>>, vector<32x128xf32>
    %cst_13 = arith.constant dense<0.000000e+00> : vector<64x128xf32>
    %13 = tpu.matmul %11, %12, %cst_13 {dimension_numbers = #tpu.dot_dimension_numbers<[1], [0], [0], [1], [0, 0, 1, 1], [], []>} : vector<64x32xf32>, vector<32x128xf32>, vector<64x128xf32> -> vector<64x128xf32>
    %c0_14 = arith.constant 0 : index
    %c0_15 = arith.constant 0 : index
    %14 = vector.load %arg7[%c0_14, %c0_15] : memref<1x128xf32, #tpu.memory_space<vmem>>, vector<1x128xf32>
    %15 = vector.broadcast %14 : vector<1x128xf32> to vector<64x128xf32>
    %16 = arith.addf %13, %15 : vector<64x128xf32>
    %c0_16 = arith.constant 0 : index
    %c0_17 = arith.constant 0 : index
    %17 = vector.load %arg8[%c0_16, %c0_17] : memref<64x128xf32, #tpu.memory_space<vmem>>, vector<64x128xf32>
    tpu.vector_store %arg8[%c0_16, %c0_17], %16 {strides = array<i32>} : memref<64x128xf32, #tpu.memory_space<vmem>>, vector<64x128xf32>,
    return
  }
  func.func @transform_0(%arg0: i32) -> (i32, i32) {
    %c0_i32 = arith.constant 0 : i32
    %c0_i32_0 = arith.constant 0 : i32
    return %arg0, %c0_i32 : i32, i32
  }
  func.func @transform_1(%arg0: i32) -> (i32, i32) {
    %c0_i32 = arith.constant 0 : i32
    %c0_i32_0 = arith.constant 0 : i32
    return %arg0, %c0_i32 : i32, i32
  }
  func.func @transform_2(%arg0: i32) -> (i32, i32) {
    %c0_i32 = arith.constant 0 : i32
    %c0_i32_0 = arith.constant 0 : i32
    %c0_i32_1 = arith.constant 0 : i32
    return %c0_i32, %c0_i32_0 : i32, i32
  }
  func.func @transform_3(%arg0: i32) -> (i32, i32) {
    %c0_i32 = arith.constant 0 : i32
    %c0_i32_0 = arith.constant 0 : i32
    %c0_i32_1 = arith.constant 0 : i32
    return %c0_i32, %c0_i32_0 : i32, i32
  }
  func.func @transform_4(%arg0: i32) -> (i32, i32) {
    %c0_i32 = arith.constant 0 : i32
    %c0_i32_0 = arith.constant 0 : i32
    %c0_i32_1 = arith.constant 0 : i32
    return %c0_i32, %c0_i32_0 : i32, i32
  }
  func.func @transform_5(%arg0: i32) -> (i32, i32) {
    %c0_i32 = arith.constant 0 : i32
    %c0_i32_0 = arith.constant 0 : i32
    %c0_i32_1 = arith.constant 0 : i32
    return %c0_i32, %c0_i32_0 : i32, i32
  }
  func.func @transform_6(%arg0: i32) -> (i32, i32) {
    %c0_i32 = arith.constant 0 : i32
    %c0_i32_0 = arith.constant 0 : i32
    %c0_i32_1 = arith.constant 0 : i32
    return %c0_i32, %c0_i32_0 : i32, i32
  }
  func.func @transform_7(%arg0: i32) -> (i32, i32) {
    %c0_i32 = arith.constant 0 : i32
    %c0_i32_0 = arith.constant 0 : i32
    return %arg0, %c0_i32 : i32, i32
  }
}

</mosaic_0001>

<llo_original>
// kernel: tpu_custom_call.1
$region0: #{tpu_custom_call.1}
  #allocation0 [shape = 'u32[]', space=smem, size = 0x4, offset = 0x4, fixed_abs, tag = 'smem constant byte address 0x4 - core index']
  #allocation1 [shape = 'u32[144,128]{1,0:T(1,128)}', space=vmem, size = 0x12000, scoped, tag = 'internal scratch']
  %s0 = inlined_call_operand.vmem [shape: f32[64,24], index: 0, kind: input, shape index: {}]
  %s1 = inlined_call_operand.vmem [shape: f32[64,2], index: 1, kind: input, shape index: {}]
  %s2 = inlined_call_operand.vmem [shape: f32[24,32], index: 2, kind: input, shape index: {}]
  %s3 = inlined_call_operand.vmem [shape: f32[2,32], index: 3, kind: input, shape index: {}]
  %s4 = inlined_call_operand.vmem [shape: f32[1,32], index: 4, kind: input, shape index: {}]
  %s5 = inlined_call_operand.vmem [shape: f32[32,128], index: 5, kind: input, shape index: {}]
  %s6 = inlined_call_operand.vmem [shape: f32[1,128], index: 6, kind: input, shape index: {}]
  %s7 = inlined_call_operand.hbm [shape: f32[64,128], index: 7, kind: output, shape index: {}]
  %s8 = sld [smem:[#allocation0]]
  $region38: #{tpu_custom_call.1} parent=0
    _
  %s10 = ssub.s32 1, %s8
  %s11 = scalar_select 0, %s10, %s8
  $region1: #{tpu_custom_call.1} parent=0
    #allocation2 [shape = 'u8[32768]{0}', space=vmem, size = 0x8000, scoped, tag = 'output window, operand 0, single buffered']
    #allocation3 [shape = 's32[1]{0}', space=sflag, size = 0x4, scoped, tag = 'scoped memory for tpu_custom_call.1']
    %12 = vsyncpa [#allocation3], 0
    // Predicated region
    $region2: #{tpu_custom_call.1} parent=1 // pred_check
      _
    $region3: #{tpu_custom_call.1} parent=1 // pred_check_branch
      %14 = sbr.rel (0) target = $region5
    $region4: #{tpu_custom_call.1} parent=1 // pred_region
      _
    $region5: #{tpu_custom_call.1} parent=1 // pred_fallthru
      _
    // Predicated region
    $region6: #{tpu_custom_call.1} parent=1 // pred_check
      _
    $region7: #{tpu_custom_call.1} parent=1 // pred_check_branch
      %16 = sbr.rel (0) target = $region9
    $region8: #{tpu_custom_call.1} parent=1 // pred_region
      _
    $region9: #{tpu_custom_call.1} parent=1 // pred_fallthru
      _
    // Predicated region
    $region10: #{tpu_custom_call.1} parent=1 // pred_check
      _
    $region11: #{tpu_custom_call.1} parent=1 // pred_check_branch
      %18 = sbr.rel (0) target = $region13
    $region12: #{tpu_custom_call.1} parent=1 // pred_region
      _
    $region13: #{tpu_custom_call.1} parent=1 // pred_fallthru
      _
    // Predicated region
    $region14: #{tpu_custom_call.1} parent=1 // pred_check
      _
    $region15: #{tpu_custom_call.1} parent=1 // pred_check_branch
      %20 = sbr.rel (0) target = $region17
    $region16: #{tpu_custom_call.1} parent=1 // pred_region
      _
    $region17: #{tpu_custom_call.1} parent=1 // pred_fallthru
      _
    // Predicated region
    $region18: #{tpu_custom_call.1} parent=1 // pred_check
      _
    $region19: #{tpu_custom_call.1} parent=1 // pred_check_branch
      %22 = sbr.rel (0) target = $region21
    $region20: #{tpu_custom_call.1} parent=1 // pred_region
      _
    $region21: #{tpu_custom_call.1} parent=1 // pred_fallthru
      _
    // Predicated region
    $region22: #{tpu_custom_call.1} parent=1 // pred_check
      _
    $region23: #{tpu_custom_call.1} parent=1 // pred_check_branch
      %24 = sbr.rel (0) target = $region25
    $region24: #{tpu_custom_call.1} parent=1 // pred_region
      _
    $region25: #{tpu_custom_call.1} parent=1 // pred_fallthru
      _
    // Predicated region
    $region26: #{tpu_custom_call.1} parent=1 // pred_check
      _
    $region27: #{tpu_custom_call.1} parent=1 // pred_check_branch
      %26 = sbr.rel (0) target = $region29
    $region28: #{tpu_custom_call.1} parent=1 // pred_region
      _
    $region29: #{tpu_custom_call.1} parent=1 // pred_fallthru
      _
    %v27 = vld [vmem:[%s0] sm:$0xff]
    %v28 = vld [vmem:[%s0 + $0x8] sm:$0xff]
    %v29 = vld [vmem:[%s0 + $0x10] sm:$0xff]
    %v30 = vld [vmem:[%s0 + $0x18] sm:$0xff]
    %v31 = vld [vmem:[%s0 + $0x20] sm:$0xff]
    %v32 = vld [vmem:[%s0 + $0x28] sm:$0xff]
    %v33 = vld [vmem:[%s0 + $0x30] sm:$0xff]
    %v34 = vld [vmem:[%s0 + $0x38] sm:$0xff]
    %v35 = vld [vmem:[%s2] sm:$0xff]
    %v36 = vld [vmem:[%s2 + $0x8] sm:$0xff]
    %v37 = vld [vmem:[%s2 + $0x10] sm:$0xff]
    %v38 = vld [vmem:[%s1] sm:$0xff]
    %v39 = vld [vmem:[%s1 + $0x8] sm:$0xff]
    %v40 = vld [vmem:[%s1 + $0x10] sm:$0xff]
    %v41 = vld [vmem:[%s1 + $0x18] sm:$0xff]
    %v42 = vld [vmem:[%s1 + $0x20] sm:$0xff]
    %v43 = vld [vmem:[%s1 + $0x28] sm:$0xff]
    %v44 = vld [vmem:[%s1 + $0x30] sm:$0xff]
    %v45 = vld [vmem:[%s1 + $0x38] sm:$0xff]
    %v46 = vld [vmem:[%s3] sm:$0x3]
    %vm47 = vcmask 15360
    %v49 = vsel %vm47, %v38, 0
    %v52 = vsel %vm47, %v39, 0
    %v55 = vsel %vm47, %v40, 0
    %v58 = vsel %vm47, %v41, 0
    %v61 = vsel %vm47, %v42, 0
    %v64 = vsel %vm47, %v43, 0
    %v67 = vsel %vm47, %v44, 0
    %v70 = vsel %vm47, %v45, 0
    %vm72 = vcmask 1041408
    %v74 = vsel %vm72, %v46, 0
    %76 = vmatprep.subr.mxu0 0.0
    %77 = vmatpush1.msra.mxu0 %v74
    %78 = vmatprep.subr.mxu0 0.0
    %79 = vmatpush1.msra.mxu0 0.0
    %80 = vmatprep.subr.mxu0 0.0
    %81 = vmatpush1.msra.mxu0 0.0
    %82 = vmatprep.subr.mxu0 0.0
    %83 = vmatpush1.msra.mxu0 0.0
    %84 = vmatprep.subr.mxu0 0.0
    %85 = vmatpush1.msra.mxu0 0.0
    %86 = vmatprep.subr.mxu0 0.0
    %87 = vmatpush1.msra.mxu0 0.0
    %88 = vmatprep.subr.mxu0 0.0
    %89 = vmatpush1.msra.mxu0 0.0
    %90 = vmatprep.subr.mxu0 0.0
    %91 = vmatpush1.msra.mxu0 0.0
    %92 = vmatprep.subr.mxu0 0.0
    %93 = vmatpush1.msra.mxu0 0.0
    %94 = vmatprep.subr.mxu0 0.0
    %95 = vmatpush1.msra.mxu0 0.0
    %96 = vmatprep.subr.mxu0 0.0
    %97 = vmatpush1.msra.mxu0 0.0
    %98 = vmatprep.subr.mxu0 0.0
    %99 = vmatpush1.msra.mxu0 0.0
    %100 = vmatprep.subr.mxu0 0.0
    %101 = vmatpush1.msra.mxu0 0.0
    %102 = vmatprep.subr.mxu0 0.0
    %103 = vmatpush1.msra.mxu0 0.0
    %104 = vmatprep.subr.mxu0 0.0
    %105 = vmatpush1.msra.mxu0 0.0
    %106 = vmatprep.subr.mxu0 0.0
    %107 = vmatpush1.msra.mxu0 0.0
    %108 = vmatprep.subr.mxu0 0.0
    %109 = vmatpush1.msra.mxu0 0.0
    %110 = vmatprep.subr.mxu0 0.0
    %111 = vmatpush1.msra.mxu0 0.0
    %112 = vmatprep.subr.mxu0 0.0
    %113 = vmatpush1.msra.mxu0 0.0
    %114 = vmatprep.subr.mxu0 0.0
    %115 = vmatpush1.msra.mxu0 0.0
    %116 = vmatprep.subr.mxu0 0.0
    %117 = vmatpush1.msra.mxu0 0.0
    %118 = vmatprep.subr.mxu0 0.0
    %119 = vmatpush1.msra.mxu0 0.0
    %120 = vmatprep.subr.mxu0 0.0
    %121 = vmatpush1.msra.mxu0 0.0
    %122 = vmatprep.subr.mxu0 0.0
    %123 = vmatpush1.msra.mxu0 0.0
    %124 = vmatprep.subr.mxu0 0.0
    %125 = vmatpush1.msra.mxu0 0.0
    %126 = vmatprep.subr.mxu0 0.0
    %127 = vmatpush1.msra.mxu0 0.0
    %128 = vmatprep.subr.mxu0 0.0
    %129 = vmatpush1.msra.mxu0 0.0
    %130 = vmatprep.subr.mxu0 0.0
    %131 = vmatpush1.msra.mxu0 0.0
    %132 = vmatprep.subr.mxu0 0.0
    %133 = vmatpush1.msra.mxu0 0.0
    %134 = vmatprep.subr.mxu0 0.0
    %135 = vmatpush1.msra.mxu0 0.0
    %136 = vmatprep.subr.mxu0 0.0
    %137 = vmatpush1.msra.mxu0 0.0
    %138 = vmatprep.subr.mxu0 0.0
    %139 = vmatpush1.msra.mxu0 0.0
    %140 = vmatprep.mubr.f32.mxu0 0.0
    %141 = vmatmul.mubr.f32.gmra.mrb[0].mxu0 %v49
    %v142 = vpop.f32.mrb[0].mxu0
    %v143 = vadd.f32 0.0, %v142
    %v144 = vpop.f32.mrb[0].mxu0
    %145 = vmatprep.mubr.f32.mxu0 0.0
    %146 = vmatmul.mubr.f32.gmra.mrb[0].mxu0 %v52
    %v147 = vpop.f32.mrb[0].mxu0
    %v148 = vadd.f32 0.0, %v147
    %v149 = vpop.f32.mrb[0].mxu0
    %150 = vmatprep.mubr.f32.mxu0 0.0
    %151 = vmatmul.mubr.f32.gmra.mrb[0].mxu0 %v55
    %v152 = vpop.f32.mrb[0].mxu0
    %v153 = vadd.f32 0.0, %v152
    %v154 = vpop.f32.mrb[0].mxu0
    %155 = vmatprep.mubr.f32.mxu0 0.0
    %156 = vmatmul.mubr.f32.gmra.mrb[0].mxu0 %v58
    %v157 = vpop.f32.mrb[0].mxu0
    %v158 = vadd.f32 0.0, %v157
    %v159 = vpop.f32.mrb[0].mxu0
    %160 = vmatprep.mubr.f32.mxu0 0.0
    %161 = vmatmul.mubr.f32.gmra.mrb[0].mxu0 %v61
    %v162 = vpop.f32.mrb[0].mxu0
    %v163 = vadd.f32 0.0, %v162
    %v164 = vpop.f32.mrb[0].mxu0
    %165 = vmatprep.mubr.f32.mxu0 0.0
    %166 = vmatmul.mubr.f32.gmra.mrb[0].mxu0 %v64
    %v167 = vpop.f32.mrb[0].mxu0
    %v168 = vadd.f32 0.0, %v167
    %v169 = vpop.f32.mrb[0].mxu0
    %170 = vmatprep.mubr.f32.mxu0 0.0
    %171 = vmatmul.mubr.f32.gmra.mrb[0].mxu0 %v67
    %v172 = vpop.f32.mrb[0].mxu0
    %v173 = vadd.f32 0.0, %v172
    %v174 = vpop.f32.mrb[0].mxu0
    %175 = vmatprep.mubr.f32.mxu0 0.0
    %176 = vmatmul.mubr.f32.gmra.mrb[0].mxu0 %v70
    %v177 = vpop.f32.mrb[0].mxu0
    %v178 = vadd.f32 0.0, %v177
    %v179 = vpop.f32.mrb[0].mxu0
    %180 = vdwg.mxu0
    %vm181 = vcmask 195584
    %v183 = vsel %vm181, %v27, 0
    %v186 = vsel %vm181, %v28, 0
    %v189 = vsel %vm181, %v29, 0
    %v192 = vsel %vm181, %v30, 0
    %v195 = vsel %vm181, %v31, 0
    %v198 = vsel %vm181, %v32, 0
    %v201 = vsel %vm181, %v33, 0
    %v204 = vsel %vm181, %v34, 0
    %206 = vmatprep.subr.mxu0 0.0
    %207 = vmatpush1.msra.mxu0 %v35
    %208 = vmatprep.subr.mxu0 0.0
    %209 = vmatpush1.msra.mxu0 %v36
    %210 = vmatprep.subr.mxu0 0.0
    %211 = vmatpush1.msra.mxu0 %v37
    %212 = vmatprep.subr.mxu0 0.0
    %213 = vmatpush1.msra.mxu0 0.0
    %214 = vmatprep.subr.mxu0 0.0
    %215 = vmatpush1.msra.mxu0 0.0
    %216 = vmatprep.subr.mxu0 0.0
    %217 = vmatpush1.msra.mxu0 0.0
    %218 = vmatprep.subr.mxu0 0.0
    %219 = vmatpush1.msra.mxu0 0.0
    %220 = vmatprep.subr.mxu0 0.0
    %221 = vmatpush1.msra.mxu0 0.0
    %222 = vmatprep.subr.mxu0 0.0
    %223 = vmatpush1.msra.mxu0 0.0
    %224 = vmatprep.subr.mxu0 0.0
    %225 = vmatpush1.msra.mxu0 0.0
    %226 = vmatprep.subr.mxu0 0.0
    %227 = vmatpush1.msra.mxu0 0.0
    %228 = vmatprep.subr.mxu0 0.0
    %229 = vmatpush1.msra.mxu0 0.0
    %230 = vmatprep.subr.mxu0 0.0
    %231 = vmatpush1.msra.mxu0 0.0
    %232 = vmatprep.subr.mxu0 0.0
    %233 = vmatpush1.msra.mxu0 0.0
    %234 = vmatprep.subr.mxu0 0.0
    %235 = vmatpush1.msra.mxu0 0.0
    %236 = vmatprep.subr.mxu0 0.0
    %237 = vmatpush1.msra.mxu0 0.0
    %238 = vmatprep.subr.mxu0 0.0
    %239 = vmatpush1.msra.mxu0 0.0
    %240 = vmatprep.subr.mxu0 0.0
    %241 = vmatpush1.msra.mxu0 0.0
    %242 = vmatprep.subr.mxu0 0.0
    %243 = vmatpush1.msra.mxu0 0.0
    %244 = vmatprep.subr.mxu0 0.0
    %245 = vmatpush1.msra.mxu0 0.0
    %246 = vmatprep.subr.mxu0 0.0
    %247 = vmatpush1.msra.mxu0 0.0
    %248 = vmatprep.subr.mxu0 0.0
    %249 = vmatpush1.msra.mxu0 0.0
    %250 = vmatprep.subr.mxu0 0.0
    %251 = vmatpush1.msra.mxu0 0.0
    %252 = vmatprep.subr.mxu0 0.0
    %253 = vmatpush1.msra.mxu0 0.0
    %254 = vmatprep.subr.mxu0 0.0
    %255 = vmatpush1.msra.mxu0 0.0
    %256 = vmatprep.subr.mxu0 0.0
    %257 = vmatpush1.msra.mxu0 0.0
    %258 = vmatprep.subr.mxu0 0.0
    %259 = vmatpush1.msra.mxu0 0.0
    %260 = vmatprep.subr.mxu0 0.0
    %261 = vmatpush1.msra.mxu0 0.0
    %262 = vmatprep.subr.mxu0 0.0
    %263 = vmatpush1.msra.mxu0 0.0
    %264 = vmatprep.subr.mxu0 0.0
    %265 = vmatpush1.msra.mxu0 0.0
    %266 = vmatprep.subr.mxu0 0.0
    %267 = vmatpush1.msra.mxu0 0.0
    %268 = vmatprep.subr.mxu0 0.0
    %269 = vmatpush1.msra.mxu0 0.0
    %270 = vmatprep.mubr.f32.mxu0 0.0
    %271 = vmatmul.mubr.f32.gmra.mrb[0].mxu0 %v183
    %v272 = vpop.f32.mrb[0].mxu0
    %v273 = vadd.f32 %v143, %v272
    %v274 = vpop.f32.mrb[0].mxu0
    %275 = vmatprep.mubr.f32.mxu0 0.0
    %276 = vmatmul.mubr.f32.gmra.mrb[0].mxu0 %v186
    %v277 = vpop.f32.mrb[0].mxu0
    %v278 = vadd.f32 %v148, %v277
    %v279 = vpop.f32.mrb[0].mxu0
    %280 = vmatprep.mubr.f32.mxu0 0.0
    %281 = vmatmul.mubr.f32.gmra.mrb[0].mxu0 %v189
    %v282 = vpop.f32.mrb[0].mxu0
    %v283 = vadd.f32 %v153, %v282
    %v284 = vpop.f32.mrb[0].mxu0
    %285 = vmatprep.mubr.f32.mxu0 0.0
    %286 = vmatmul.mubr.f32.gmra.mrb[0].mxu0 %v192
    %v287 = vpop.f32.mrb[0].mxu0
    %v288 = vadd.f32 %v158, %v287
    %v289 = vpop.f32.mrb[0].mxu0
    %290 = vmatprep.mubr.f32.mxu0 0.0
    %291 = vmatmul.mubr.f32.gmra.mrb[0].mxu0 %v195
    %v292 = vpop.f32.mrb[0].mxu0
    %v293 = vadd.f32 %v163, %v292
    %v294 = vpop.f32.mrb[0].mxu0
    %295 = vmatprep.mubr.f32.mxu0 0.0
    %296 = vmatmul.mubr.f32.gmra.mrb[0].mxu0 %v198
    %v297 = vpop.f32.mrb[0].mxu0
    %v298 = vadd.f32 %v168, %v297
    %v299 = vpop.f32.mrb[0].mxu0
    %300 = vmatprep.mubr.f32.mxu0 0.0
    %301 = vmatmul.mubr.f32.gmra.mrb[0].mxu0 %v201
    %v302 = vpop.f32.mrb[0].mxu0
    %v303 = vadd.f32 %v173, %v302
    %v304 = vpop.f32.mrb[0].mxu0
    %305 = vmatprep.mubr.f32.mxu0 0.0
    %306 = vmatmul.mubr.f32.gmra.mrb[0].mxu0 %v204
    %v307 = vpop.f32.mrb[0].mxu0
    %v308 = vadd.f32 %v178, %v307
    %v309 = vpop.f32.mrb[0].mxu0
    %310 = vdwg.mxu0
    %v311 = vld [vmem:[%s4] sm:$0x1]
    %v313 = vlaneseq
    %v314 = vshrl.u32 %v313, 7
    %v315 = vsub.s32 0, %v314
    %v316 = vrot.slane %v311, %v315
    %v318 = vadd.f32 %v273, %v316
    %v319 = vadd.f32 %v278, %v316
    %v320 = vadd.f32 %v283, %v316
    %v321 = vadd.f32 %v288, %v316
    %v322 = vadd.f32 %v293, %v316
    %v323 = vadd.f32 %v298, %v316
    %v324 = vadd.f32 %v303, %v316
    %v325 = vadd.f32 %v308, %v316
    %v326 = vmax.f32 %v318, 0.0
    %v327 = vmax.f32 %v319, 0.0
    %v328 = vmax.f32 %v320, 0.0
    %v329 = vmax.f32 %v321, 0.0
    %v330 = vmax.f32 %v322, 0.0
    %v331 = vmax.f32 %v323, 0.0
    %v332 = vmax.f32 %v324, 0.0
    %v333 = vmax.f32 %v325, 0.0
    %v334 = vld [vmem:[%s5] sm:$0xff]
    %v335 = vld [vmem:[%s5 + $0x8] sm:$0xff]
    %v336 = vld [vmem:[%s5 + $0x10] sm:$0xff]
    %v337 = vld [vmem:[%s5 + $0x18] sm:$0xff]
    %v338 = vld [vmem:[%s6] sm:$0x1]
    %v340 = vlaneseq
    %v341 = vshrl.u32 %v340, 7
    %v342 = vsub.s32 0, %v341
    %v343 = vrot.slane %v338, %v342
    %vm345 = vcmask 261120
    %v347 = vsel %vm345, %v326, 0
    %v350 = vsel %vm345, %v327, 0
    %v353 = vsel %vm345, %v328, 0
    %v356 = vsel %vm345, %v329, 0
    %v359 = vsel %vm345, %v330, 0
    %v362 = vsel %vm345, %v331, 0
    %v365 = vsel %vm345, %v332, 0
    %v368 = vsel %vm345, %v333, 0
    %370 = vmatprep.subr.mxu0 0.0
    %371 = vmatpush1.msra.mxu0 %v334
    %372 = vmatprep.subr.mxu0 0.0
    %373 = vmatpush1.msra.mxu0 %v335
    %374 = vmatprep.subr.mxu0 0.0
    %375 = vmatpush1.msra.mxu0 %v336
    %376 = vmatprep.subr.mxu0 0.0
    %377 = vmatpush1.msra.mxu0 %v337
    %378 = vmatprep.subr.mxu0 0.0
    %379 = vmatpush1.msra.mxu0 0.0
    %380 = vmatprep.subr.mxu0 0.0
    %381 = vmatpush1.msra.mxu0 0.0
    %382 = vmatprep.subr.mxu0 0.0
    %383 = vmatpush1.msra.mxu0 0.0
    %384 = vmatprep.subr.mxu0 0.0
    %385 = vmatpush1.msra.mxu0 0.0
    %386 = vmatprep.subr.mxu0 0.0
    %387 = vmatpush1.msra.mxu0 0.0
    %388 = vmatprep.subr.mxu0 0.0
    %389 = vmatpush1.msra.mxu0 0.0
    %390 = vmatprep.subr.mxu0 0.0
    %391 = vmatpush1.msra.mxu0 0.0
    %392 = vmatprep.subr.mxu0 0.0
    %393 = vmatpush1.msra.mxu0 0.0
    %394 = vmatprep.subr.mxu0 0.0
    %395 = vmatpush1.msra.mxu0 0.0
    %396 = vmatprep.subr.mxu0 0.0
    %397 = vmatpush1.msra.mxu0 0.0
    %398 = vmatprep.subr.mxu0 0.0
    %399 = vmatpush1.msra.mxu0 0.0
    %400 = vmatprep.subr.mxu0 0.0
    %401 = vmatpush1.msra.mxu0 0.0
    %402 = vmatprep.subr.mxu0 0.0
    %403 = vmatpush1.msra.mxu0 0.0
    %404 = vmatprep.subr.mxu0 0.0
    %405 = vmatpush1.msra.mxu0 0.0
    %406 = vmatprep.subr.mxu0 0.0
    %407 = vmatpush1.msra.mxu0 0.0
    %408 = vmatprep.subr.mxu0 0.0
    %409 = vmatpush1.msra.mxu0 0.0
    %410 = vmatprep.subr.mxu0 0.0
    %411 = vmatpush1.msra.mxu0 0.0
    %412 = vmatprep.subr.mxu0 0.0
    %413 = vmatpush1.msra.mxu0 0.0
    %414 = vmatprep.subr.mxu0 0.0
    %415 = vmatpush1.msra.mxu0 0.0
    %416 = vmatprep.subr.mxu0 0.0
    %417 = vmatpush1.msra.mxu0 0.0
    %418 = vmatprep.subr.mxu0 0.0
    %419 = vmatpush1.msra.mxu0 0.0
    %420 = vmatprep.subr.mxu0 0.0
    %421 = vmatpush1.msra.mxu0 0.0
    %422 = vmatprep.subr.mxu0 0.0
    %423 = vmatpush1.msra.mxu0 0.0
    %424 = vmatprep.subr.mxu0 0.0
    %425 = vmatpush1.msra.mxu0 0.0
    %426 = vmatprep.subr.mxu0 0.0
    %427 = vmatpush1.msra.mxu0 0.0
    %428 = vmatprep.subr.mxu0 0.0
    %429 = vmatpush1.msra.mxu0 0.0
    %430 = vmatprep.subr.mxu0 0.0
    %431 = vmatpush1.msra.mxu0 0.0
    %432 = vmatprep.subr.mxu0 0.0
    %433 = vmatpush1.msra.mxu0 0.0
    %434 = vmatprep.mubr.f32.mxu0 0.0
    %435 = vmatmul.mubr.f32.gmra.mrb[0].mxu0 %v347
    %v436 = vpop.f32.mrb[0].mxu0
    %v437 = vadd.f32 %v343, %v436
    %v438 = vpop.f32.mrb[0].mxu0
    %439 = vmatprep.mubr.f32.mxu0 0.0
    %440 = vmatmul.mubr.f32.gmra.mrb[0].mxu0 %v350
    %v441 = vpop.f32.mrb[0].mxu0
    %v442 = vadd.f32 %v343, %v441
    %v443 = vpop.f32.mrb[0].mxu0
    %444 = vmatprep.mubr.f32.mxu0 0.0
    %445 = vmatmul.mubr.f32.gmra.mrb[0].mxu0 %v353
    %v446 = vpop.f32.mrb[0].mxu0
    %v447 = vadd.f32 %v343, %v446
    %v448 = vpop.f32.mrb[0].mxu0
    %449 = vmatprep.mubr.f32.mxu0 0.0
    %450 = vmatmul.mubr.f32.gmra.mrb[0].mxu0 %v356
    %v451 = vpop.f32.mrb[0].mxu0
    %v452 = vadd.f32 %v343, %v451
    %v453 = vpop.f32.mrb[0].mxu0
    %454 = vmatprep.mubr.f32.mxu0 0.0
    %455 = vmatmul.mubr.f32.gmra.mrb[0].mxu0 %v359
    %v456 = vpop.f32.mrb[0].mxu0
    %v457 = vadd.f32 %v343, %v456
    %v458 = vpop.f32.mrb[0].mxu0
    %459 = vmatprep.mubr.f32.mxu0 0.0
    %460 = vmatmul.mubr.f32.gmra.mrb[0].mxu0 %v362
    %v461 = vpop.f32.mrb[0].mxu0
    %v462 = vadd.f32 %v343, %v461
    %v463 = vpop.f32.mrb[0].mxu0
    %464 = vmatprep.mubr.f32.mxu0 0.0
    %465 = vmatmul.mubr.f32.gmra.mrb[0].mxu0 %v365
    %v466 = vpop.f32.mrb[0].mxu0
    %v467 = vadd.f32 %v343, %v466
    %v468 = vpop.f32.mrb[0].mxu0
    %469 = vmatprep.mubr.f32.mxu0 0.0
    %470 = vmatmul.mubr.f32.gmra.mrb[0].mxu0 %v368
    %v471 = vpop.f32.mrb[0].mxu0
    %v472 = vadd.f32 %v343, %v471
    %v473 = vpop.f32.mrb[0].mxu0
    %474 = vdwg.mxu0
    %475 = vst [vmem:[#allocation2] sm:$0xff] %v437
    %476 = vst [vmem:[#allocation2 + $0x8] sm:$0xff] %v442
    %477 = vst [vmem:[#allocation2 + $0x10] sm:$0xff] %v447
    %478 = vst [vmem:[#allocation2 + $0x18] sm:$0xff] %v452
    %479 = vst [vmem:[#allocation2 + $0x20] sm:$0xff] %v457
    %480 = vst [vmem:[#allocation2 + $0x28] sm:$0xff] %v462
    %481 = vst [vmem:[#allocation2 + $0x30] sm:$0xff] %v467
    %482 = vst [vmem:[#allocation2 + $0x38] sm:$0xff] %v472
    // Predicated region
    $region30: #{tpu_custom_call.1} parent=1 // pred_check
      _
    $region31: #{tpu_custom_call.1} parent=1 // pred_check_branch
      %484 = sbr.rel (0) target = $region33
    $region32: #{tpu_custom_call.1} parent=1 // pred_region
      %s486 = ssub.s32 1024, 1024
      %487 = vsyncadd [#allocation3], %s486
      %s488 = sshll.u32 [#allocation2], 4
      %s489 = int_to_ptr.vmem [resolvable:$true] %s488
      %494 = dma.vmem_to_hbm [thread:$0]  %s489, 1024, %s7, [#allocation3], 128, 128, 8
    $region33: #{tpu_custom_call.1} parent=1 // pred_fallthru
      _
    // Predicated region
    $region34: #{tpu_custom_call.1} parent=1 // pred_check
      _
    $region35: #{tpu_custom_call.1} parent=1 // pred_check_branch
      %496 = sbr.rel (0) target = $region37
    $region36: #{tpu_custom_call.1} parent=1 // pred_region
      %497 = dma.done [#allocation3], 1024
    $region37: #{tpu_custom_call.1} parent=1 // pred_fallthru
      _
    %498 = vsyncpa [#allocation3], 1

</llo_original>
